<compile_context>
chip_gen: v7x
topology: tpu7x:2x2x1
jax: 0.10.0
libtpu: 0.0.40
codegen_flags: <defaults>
</compile_context>

<pallas_src>
import functools

import jax
import jax.numpy as jnp
from jax.experimental import pallas as pl
from jax.experimental.pallas import tpu as pltpu

BN_EPS = 1e-5
SOFTPLUS_THRESHOLD = 20.0
LANE = 128


def _round_up(x, m):
    return (x + m - 1) // m * m


def _softplus(x):
    # F.softplus (beta=1, threshold=20).  log1p-accurate without a log1p
    # primitive: when exp(x) is tiny, log(1+e) ~= e (error <= e^2/2 < 5e-9).
    e = jnp.exp(jnp.minimum(x, SOFTPLUS_THRESHOLD))
    sp = jnp.where(e < 1e-4, e, jnp.log(1.0 + e))
    return jnp.where(x > SOFTPLUS_THRESHOLD, x, sp)


def _batchnorm_train(x, gamma, beta):
    # BatchNorm1d training mode: batch mean / biased variance, single pass
    # (var = E[x^2] - mean^2), clamped at 0 to avoid rsqrt of a tiny negative
    # from f32 cancellation.
    inv_b = 1.0 / x.shape[0]
    s1 = jnp.sum(x, axis=0, keepdims=True)
    s2 = jnp.sum(x * x, axis=0, keepdims=True)
    mean = s1 * inv_b
    var = jnp.maximum(s2 * inv_b - mean * mean, 0.0)
    return (x - mean) * jax.lax.rsqrt(var + BN_EPS) * gamma + beta


def _cond_model_kernel(yy_ref, w_ref, g_ref, wstack_ref, pvec_ref, out_ref):
    w_dim = w_ref.shape[1]
    mxu_dtype = wstack_ref.dtype  # bf16 MXU operands, f32 accumulation

    # Coalesced parameter rows (static sublane slices; zero runtime cost).
    pv = pvec_ref[...]                                   # [12, P] f32
    bn0g, bn0b = pv[0:1, :w_dim], pv[1:2, :w_dim]
    b1, bn1g, bn1b = pv[2:3, :w_dim], pv[3:4, :w_dim], pv[4:5, :w_dim]
    b2, bn2g, bn2b = pv[5:6, :w_dim], pv[6:7, :w_dim], pv[7:8, :w_dim]
    b3, bn3g, bn3b = pv[8:9, :w_dim], pv[9:10, :w_dim], pv[10:11, :w_dim]
    b4 = pv[11:12, :]                                    # padded to out lanes

    # Pre-gathered (wrapper-side) embedding gates, lane-aligned slices.
    g = g_ref[...]                                       # [B, 3*w_dim] f32
    g1 = g[:, :w_dim]
    g2 = g[:, w_dim:2 * w_dim]
    g3 = g[:, 2 * w_dim:3 * w_dim]

    # w = self.norm(w)
    w = _batchnorm_train(w_ref[...], bn0g, bn0b)

    # lin1: single fused matmul on the lane-padded concat([y, noisy_y]).
    h = jnp.dot(yy_ref[...], wstack_ref[0][:, :w_dim],
                preferred_element_type=jnp.float32) + b1
    h = _batchnorm_train(g1 * h, bn1g, bn1b)
    h = _softplus(h) * w

    # lin2
    h = jnp.dot(h.astype(mxu_dtype), wstack_ref[1][:w_dim, :w_dim],
                preferred_element_type=jnp.float32) + b2
    h = _batchnorm_train(g2 * h, bn2g, bn2b)
    h = _softplus(h)

    # lin3
    h = jnp.dot(h.astype(mxu_dtype), wstack_ref[2][:w_dim, :w_dim],
                preferred_element_type=jnp.float32) + b3
    h = _batchnorm_train(g3 * h, bn3g, bn3b)
    h = _softplus(h)

    # lin4 (output lanes padded to 128; wrapper slices back to y_dim).
    out_ref[...] = jnp.dot(h.astype(mxu_dtype), wstack_ref[3][:w_dim, :],
                           preferred_element_type=jnp.float32) + b4


def init_params(key, n_steps, y_dim=10, w_dim=128, guidance=True):
    """Deterministic synthetic parameter init matching the module's shapes."""
    n_steps = n_steps + 1
    in1 = (y_dim + y_dim) if guidance else y_dim
    ks = jax.random.split(key, 16)

    def lin_init(k, fan_in, fan_out):
        bound = 1.0 / jnp.sqrt(fan_in)
        kw, kb = jax.random.split(k)
        W = jax.random.uniform(kw, (fan_out, fan_in), jnp.float32, -bound, bound)
        b = jax.random.uniform(kb, (fan_out,), jnp.float32, -bound, bound)
        return W, b

    W1, b1 = lin_init(ks[0], in1, w_dim)
    W2, b2 = lin_init(ks[1], w_dim, w_dim)
    W3, b3 = lin_init(ks[2], w_dim, w_dim)
    W4, b4 = lin_init(ks[3], w_dim, y_dim)
    E1 = jax.random.uniform(ks[4], (n_steps, w_dim), jnp.float32)   # .uniform_()
    E2 = jax.random.uniform(ks[5], (n_steps, w_dim), jnp.float32)
    E3 = jax.random.uniform(ks[6], (n_steps, w_dim), jnp.float32)

    def bn_init(kg, kb, dim):
        g = jax.random.uniform(kg, (dim,), jnp.float32, 0.5, 1.5)
        b = 0.1 * jax.random.normal(kb, (dim,), jnp.float32)
        return g, b

    bn0g, bn0b = bn_init(ks[7], ks[8], w_dim)
    bn1g, bn1b = bn_init(ks[9], ks[10], w_dim)
    bn2g, bn2b = bn_init(ks[11], ks[12], w_dim)
    bn3g, bn3b = bn_init(ks[13], ks[14], w_dim)

    return dict(
        W1=W1, b1=b1, E1=E1, W2=W2, b2=b2, E2=E2, W3=W3, b3=b3, E3=E3,
        W4=W4, b4=b4,
        bn0g=bn0g, bn0b=bn0b, bn1g=bn1g, bn1b=bn1b,
        bn2g=bn2g, bn2b=bn2b, bn3g=bn3g, bn3b=bn3b,
    )


def preprocess_params(params, mxu_dtype=jnp.bfloat16):
    """One-time parameter prep (hoisted out of the per-call path):
    transpose weights to [in, out], zero-pad ragged lane dims to 128, stack the
    four weight matrices into one bf16 slab, coalesce all biases / BN params
    into one f32 slab, and fuse the three embedding tables for a single
    wrapper-side gather."""
    y_dim = params["W4"].shape[0]
    w_dim = params["W1"].shape[0]
    in1 = params["W1"].shape[1]
    in_pad = max(_round_up(in1, LANE), w_dim)
    out_pad = max(_round_up(y_dim, LANE), w_dim)

    def pad_T(W):  # [out, in] -> zero-padded [in_pad, out_pad] transpose
        WT = W.T
        return (jnp.zeros((in_pad, out_pad), jnp.float32)
                .at[:WT.shape[0], :WT.shape[1]].set(WT))

    w_stack = jnp.stack([pad_T(params["W1"]), pad_T(params["W2"]),
                         pad_T(params["W3"]), pad_T(params["W4"])]
                        ).astype(mxu_dtype)          # [4, in_pad, out_pad] bf16

    def row(v):
        return (jnp.zeros((out_pad,), jnp.float32)
                .at[:v.shape[0]].set(v.astype(jnp.float32)))

    pvec = jnp.stack([
        row(params["bn0g"]), row(params["bn0b"]),
        row(params["b1"]), row(params["bn1g"]), row(params["bn1b"]),
        row(params["b2"]), row(params["bn2g"]), row(params["bn2b"]),
        row(params["b3"]), row(params["bn3g"]), row(params["bn3b"]),
        row(params["b4"]),
    ])                                               # [12, out_pad] f32

    E_all = jnp.concatenate([params["E1"], params["E2"], params["E3"]],
                            axis=1).astype(jnp.float32)  # [n_steps+1, 3*w_dim]
    return dict(w_stack=w_stack, pvec=pvec, E_all=E_all)


@functools.partial(jax.jit, static_argnames=("guidance",))
def conditional_model_forward(prep, y, t, w, x_embed, noisy_y, guidance=True):
    del x_embed  # argument of the reference forward() but never used there
    B = y.shape[0]
    y_dim = y.shape[1]
    in_pad = prep["w_stack"].shape[1]
    out_pad = prep["w_stack"].shape[2]
    mxu_dtype = prep["w_stack"].dtype

    # Lane-dense [B, in_pad] slab holding concat([y, noisy_y]) (zero padded).
    yy = jnp.concatenate([y, noisy_y], axis=-1) if guidance else y
    yy = jnp.pad(yy.astype(jnp.float32), ((0, 0), (0, in_pad - yy.shape[1])))
    yy = yy.astype(mxu_dtype)

    # Embedding gates gathered OUTSIDE the kernel (cheap XLA gather; no MXU,
    # no E_all / t DMA into VMEM).  Out-of-range t clamps (JAX semantics).
    gammas = prep["E_all"][t.reshape(B).astype(jnp.int32)]   # [B, 3*w_dim] f32

    vmem = pl.BlockSpec(memory_space=pltpu.MemorySpace.VMEM)
    out = pl.pallas_call(
        _cond_model_kernel,
        out_shape=jax.ShapeDtypeStruct((B, out_pad), jnp.float32),
        in_specs=[vmem] * 5,
        out_specs=vmem,
        # Footprint is ~200 KB, far under every generation's scoped VMEM
        # default; set vmem_limit_bytes here only if the batch-grid TODO lands.
    )(yy, w.astype(jnp.float32), gammas, prep["w_stack"], prep["pvec"])
    return out[:, :y_dim]


def reference_forward(params, y, t, w, x_embed, noisy_y, mxu_dtype=None):
    """Plain-JAX reference replicating the PyTorch forward (training-mode BN).
    mxu_dtype=None -> pure f32; mxu_dtype=jnp.bfloat16 -> mirrors the kernel's
    mixed-precision matmuls (bf16 operands, f32 accumulation)."""
    del x_embed

    def dot(a, b):
        if mxu_dtype is not None:
            a = a.astype(mxu_dtype)
            b = b.astype(mxu_dtype)
        return jnp.dot(a, b, preferred_element_type=jnp.float32)

    def bn(x, g, b):
        m = jnp.mean(x, axis=0, keepdims=True)
        v = jnp.mean((x - m) ** 2, axis=0, keepdims=True)
        return (x - m) / jnp.sqrt(v + BN_EPS) * g + b

    def softplus(x):
        return jnp.where(
            x > SOFTPLUS_THRESHOLD,
            x,
            jnp.log1p(jnp.exp(jnp.minimum(x, SOFTPLUS_THRESHOLD))),
        )

    w = bn(w, params["bn0g"], params["bn0b"])
    ycat = jnp.concatenate([y, noisy_y], axis=-1)
    h = dot(ycat, params["W1"].T) + params["b1"]
    h = params["E1"][t] * h
    h = bn(h, params["bn1g"], params["bn1b"])
    h = softplus(h)
    h = h * w
    h = dot(h, params["W2"].T) + params["b2"]
    h = params["E2"][t] * h
    h = bn(h, params["bn2g"], params["bn2b"])
    h = softplus(h)
    h = dot(h, params["W3"].T) + params["b3"]
    h = params["E3"][t] * h
    h = bn(h, params["bn3g"], params["bn3b"])
    h = softplus(h)
    return dot(h, params["W4"].T) + params["b4"]


if __name__ == "__main__":
    key = jax.random.PRNGKey(0)
    k_par, k_y, k_w, k_ny, k_t, k_x = jax.random.split(key, 6)

    B, n_steps, y_dim, w_dim, x_dim = 8, 4, 10, 128, 48
    params = init_params(k_par, n_steps=n_steps, y_dim=y_dim, w_dim=w_dim, guidance=True)
    prep = preprocess_params(params)  # one-time (hoisted) weight prep

    y = jax.random.normal(k_y, (B, y_dim), jnp.float32)
    noisy_y = jax.random.normal(k_ny, (B, y_dim), jnp.float32)
    w = jax.random.normal(k_w, (B, w_dim), jnp.float32)
    t = jax.random.randint(k_t, (B,), 0, n_steps + 1, jnp.int32)
    x_embed = jax.random.normal(k_x, (B, x_dim), jnp.float32)  # unused by forward()

    out = conditional_model_forward(prep, y, t, w, x_embed, noisy_y)
    out = jax.block_until_ready(out)
    assert out.shape == (B, y_dim)

    # Tight check vs a JAX reference using the same mixed precision as the kernel.
    ref_bf16 = reference_forward(params, y, t, w, x_embed, noisy_y, mxu_dtype=jnp.bfloat16)
    assert jnp.allclose(out, ref_bf16, atol=2e-3, rtol=2e-3), (
        f"max abs err (bf16-matched ref) {jnp.max(jnp.abs(out - ref_bf16))}"
    )

    # Fidelity check vs the pure-f32 reference (loosened for bf16 MXU operands).
    ref_f32 = reference_forward(params, y, t, w, x_embed, noisy_y)
    assert jnp.allclose(out, ref_f32, atol=1e-1, rtol=1e-1), (
        f"max abs err (f32 ref) {jnp.max(jnp.abs(out - ref_f32))}"
    )

    print("KERNEL_OK")
</pallas_src>

<mosaic_0001>
module attributes {stable_mosaic.version = 11 : i64} {
  func.func @_cond_model_kernel(%arg0: memref<8x128xbf16, #tpu.memory_space<vmem>>, %arg1: memref<8x128xf32, #tpu.memory_space<vmem>>, %arg2: memref<8x384xf32, #tpu.memory_space<vmem>>, %arg3: memref<4x128x128xbf16, #tpu.memory_space<vmem>>, %arg4: memref<12x128xf32, #tpu.memory_space<vmem>>, %arg5: memref<8x128xf32, #tpu.memory_space<vmem>>) attributes {dimension_semantics = [], scalar_prefetch = 0 : i64, scratch_operands = 0 : i64, tpu.core_type = #tpu.core_type<tc>} {
    %c0 = arith.constant 0 : index
    %c0_0 = arith.constant 0 : index
    %0 = vector.load %arg4[%c0, %c0_0] : memref<12x128xf32, #tpu.memory_space<vmem>>, vector<12x128xf32>
    %1 = vector.extract_strided_slice %0 {offsets = [0, 0], sizes = [1, 128], strides = [1, 1]} : vector<12x128xf32> to vector<1x128xf32>
    %2 = vector.extract_strided_slice %0 {offsets = [1, 0], sizes = [1, 128], strides = [1, 1]} : vector<12x128xf32> to vector<1x128xf32>
    %3 = vector.extract_strided_slice %0 {offsets = [2, 0], sizes = [1, 128], strides = [1, 1]} : vector<12x128xf32> to vector<1x128xf32>
    %4 = vector.extract_strided_slice %0 {offsets = [3, 0], sizes = [1, 128], strides = [1, 1]} : vector<12x128xf32> to vector<1x128xf32>
    %5 = vector.extract_strided_slice %0 {offsets = [4, 0], sizes = [1, 128], strides = [1, 1]} : vector<12x128xf32> to vector<1x128xf32>
    %6 = vector.extract_strided_slice %0 {offsets = [5, 0], sizes = [1, 128], strides = [1, 1]} : vector<12x128xf32> to vector<1x128xf32>
    %7 = vector.extract_strided_slice %0 {offsets = [6, 0], sizes = [1, 128], strides = [1, 1]} : vector<12x128xf32> to vector<1x128xf32>
    %8 = vector.extract_strided_slice %0 {offsets = [7, 0], sizes = [1, 128], strides = [1, 1]} : vector<12x128xf32> to vector<1x128xf32>
    %9 = vector.extract_strided_slice %0 {offsets = [8, 0], sizes = [1, 128], strides = [1, 1]} : vector<12x128xf32> to vector<1x128xf32>
    %10 = vector.extract_strided_slice %0 {offsets = [9, 0], sizes = [1, 128], strides = [1, 1]} : vector<12x128xf32> to vector<1x128xf32>
    %11 = vector.extract_strided_slice %0 {offsets = [10, 0], sizes = [1, 128], strides = [1, 1]} : vector<12x128xf32> to vector<1x128xf32>
    %12 = vector.extract_strided_slice %0 {offsets = [11, 0], sizes = [1, 128], strides = [1, 1]} : vector<12x128xf32> to vector<1x128xf32>
    %c0_1 = arith.constant 0 : index
    %c0_2 = arith.constant 0 : index
    %13 = vector.load %arg2[%c0_1, %c0_2] : memref<8x384xf32, #tpu.memory_space<vmem>>, vector<8x384xf32>
    %14 = vector.extract_strided_slice %13 {offsets = [0, 0], sizes = [8, 128], strides = [1, 1]} : vector<8x384xf32> to vector<8x128xf32>
    %15 = vector.extract_strided_slice %13 {offsets = [0, 128], sizes = [8, 128], strides = [1, 1]} : vector<8x384xf32> to vector<8x128xf32>
    %16 = vector.extract_strided_slice %13 {offsets = [0, 256], sizes = [8, 128], strides = [1, 1]} : vector<8x384xf32> to vector<8x128xf32>
    %c0_3 = arith.constant 0 : index
    %c0_4 = arith.constant 0 : index
    %17 = vector.load %arg1[%c0_3, %c0_4] : memref<8x128xf32, #tpu.memory_space<vmem>>, vector<8x128xf32>
    %cst = arith.constant dense<0.000000e+00> : vector<128xf32>
    %18 = vector.multi_reduction <add>, %17, %cst [0] : vector<8x128xf32> to vector<128xf32>
    %19 = vector.shape_cast %18 : vector<128xf32> to vector<1x128xf32>
    %20 = arith.mulf %17, %17 : vector<8x128xf32>
    %cst_5 = arith.constant dense<0.000000e+00> : vector<128xf32>
    %21 = vector.multi_reduction <add>, %20, %cst_5 [0] : vector<8x128xf32> to vector<128xf32>
    %22 = vector.shape_cast %21 : vector<128xf32> to vector<1x128xf32>
    %cst_6 = arith.constant 1.250000e-01 : f32
    %23 = vector.broadcast %cst_6 : f32 to vector<1x128xf32>
    %24 = arith.mulf %19, %23 : vector<1x128xf32>
    %cst_7 = arith.constant 1.250000e-01 : f32
    %25 = vector.broadcast %cst_7 : f32 to vector<1x128xf32>
    %26 = arith.mulf %22, %25 : vector<1x128xf32>
    %27 = arith.mulf %24, %24 : vector<1x128xf32>
    %28 = arith.subf %26, %27 : vector<1x128xf32>
    %cst_8 = arith.constant 0.000000e+00 : f32
    %29 = vector.broadcast %cst_8 : f32 to vector<1x128xf32>
    %30 = arith.maximumf %28, %29 : vector<1x128xf32>
    %31 = vector.broadcast %24 : vector<1x128xf32> to vector<8x128xf32>
    %32 = arith.subf %17, %31 : vector<8x128xf32>
    %cst_9 = arith.constant 9.99999974E-6 : f32
    %33 = vector.broadcast %cst_9 : f32 to vector<1x128xf32>
    %34 = arith.addf %30, %33 : vector<1x128xf32>
    %35 = math.rsqrt %34 : vector<1x128xf32>
    %36 = vector.broadcast %35 : vector<1x128xf32> to vector<8x128xf32>
    %37 = arith.mulf %32, %36 : vector<8x128xf32>
    %38 = vector.broadcast %1 : vector<1x128xf32> to vector<8x128xf32>
    %39 = arith.mulf %37, %38 : vector<8x128xf32>
    %40 = vector.broadcast %2 : vector<1x128xf32> to vector<8x128xf32>
    %41 = arith.addf %39, %40 : vector<8x128xf32>
    %c0_10 = arith.constant 0 : index
    %c0_11 = arith.constant 0 : index
    %42 = vector.load %arg0[%c0_10, %c0_11] : memref<8x128xbf16, #tpu.memory_space<vmem>>, vector<8x128xbf16>
    %c0_12 = arith.constant 0 : index
    %c0_13 = arith.constant 0 : index
    %c0_14 = arith.constant 0 : index
    %43 = vector.load %arg3[%c0_12, %c0_13, %c0_14] : memref<4x128x128xbf16, #tpu.memory_space<vmem>>, vector<1x128x128xbf16>
    %44 = vector.shape_cast %43 : vector<1x128x128xbf16> to vector<128x128xbf16>
    %cst_15 = arith.constant dense<0.000000e+00> : vector<8x128xf32>
    %45 = tpu.matmul %42, %44, %cst_15 {dimension_numbers = #tpu.dot_dimension_numbers<[1], [0], [0], [1], [0, 0, 1, 1], [], []>} : vector<8x128xbf16>, vector<128x128xbf16>, vector<8x128xf32> -> vector<8x128xf32>
    %46 = vector.broadcast %3 : vector<1x128xf32> to vector<8x128xf32>
    %47 = arith.addf %45, %46 : vector<8x128xf32>
    %48 = arith.mulf %14, %47 : vector<8x128xf32>
    %cst_16 = arith.constant dense<0.000000e+00> : vector<128xf32>
    %49 = vector.multi_reduction <add>, %48, %cst_16 [0] : vector<8x128xf32> to vector<128xf32>
    %50 = vector.shape_cast %49 : vector<128xf32> to vector<1x128xf32>
    %51 = arith.mulf %48, %48 : vector<8x128xf32>
    %cst_17 = arith.constant dense<0.000000e+00> : vector<128xf32>
    %52 = vector.multi_reduction <add>, %51, %cst_17 [0] : vector<8x128xf32> to vector<128xf32>
    %53 = vector.shape_cast %52 : vector<128xf32> to vector<1x128xf32>
    %cst_18 = arith.constant 1.250000e-01 : f32
    %54 = vector.broadcast %cst_18 : f32 to vector<1x128xf32>
    %55 = arith.mulf %50, %54 : vector<1x128xf32>
    %cst_19 = arith.constant 1.250000e-01 : f32
    %56 = vector.broadcast %cst_19 : f32 to vector<1x128xf32>
    %57 = arith.mulf %53, %56 : vector<1x128xf32>
    %58 = arith.mulf %55, %55 : vector<1x128xf32>
    %59 = arith.subf %57, %58 : vector<1x128xf32>
    %cst_20 = arith.constant 0.000000e+00 : f32
    %60 = vector.broadcast %cst_20 : f32 to vector<1x128xf32>
    %61 = arith.maximumf %59, %60 : vector<1x128xf32>
    %62 = vector.broadcast %55 : vector<1x128xf32> to vector<8x128xf32>
    %63 = arith.subf %48, %62 : vector<8x128xf32>
    %cst_21 = arith.constant 9.99999974E-6 : f32
    %64 = vector.broadcast %cst_21 : f32 to vector<1x128xf32>
    %65 = arith.addf %61, %64 : vector<1x128xf32>
    %66 = math.rsqrt %65 : vector<1x128xf32>
    %67 = vector.broadcast %66 : vector<1x128xf32> to vector<8x128xf32>
    %68 = arith.mulf %63, %67 : vector<8x128xf32>
    %69 = vector.broadcast %4 : vector<1x128xf32> to vector<8x128xf32>
    %70 = arith.mulf %68, %69 : vector<8x128xf32>
    %71 = vector.broadcast %5 : vector<1x128xf32> to vector<8x128xf32>
    %72 = arith.addf %70, %71 : vector<8x128xf32>
    %cst_22 = arith.constant 2.000000e+01 : f32
    %73 = vector.broadcast %cst_22 : f32 to vector<8x128xf32>
    %74 = arith.minimumf %72, %73 : vector<8x128xf32>
    %75 = math.exp %74 : vector<8x128xf32>
    %cst_23 = arith.constant 9.99999974E-5 : f32
    %76 = vector.broadcast %cst_23 : f32 to vector<8x128xf32>
    %77 = arith.cmpf olt, %75, %76 : vector<8x128xf32>
    %cst_24 = arith.constant 1.000000e+00 : f32
    %78 = vector.broadcast %cst_24 : f32 to vector<8x128xf32>
    %79 = arith.addf %78, %75 : vector<8x128xf32>
    %80 = math.log %79 : vector<8x128xf32>
    %81 = arith.select %77, %75, %80 : vector<8x128xi1>, vector<8x128xf32>
    %cst_25 = arith.constant 2.000000e+01 : f32
    %82 = vector.broadcast %cst_25 : f32 to vector<8x128xf32>
    %83 = arith.cmpf ogt, %72, %82 : vector<8x128xf32>
    %84 = arith.select %83, %72, %81 : vector<8x128xi1>, vector<8x128xf32>
    %85 = arith.mulf %84, %41 : vector<8x128xf32>
    %86 = arith.truncf %85 : vector<8x128xf32> to vector<8x128xbf16>
    %c1 = arith.constant 1 : index
    %c0_26 = arith.constant 0 : index
    %c0_27 = arith.constant 0 : index
    %87 = vector.load %arg3[%c1, %c0_26, %c0_27] : memref<4x128x128xbf16, #tpu.memory_space<vmem>>, vector<1x128x128xbf16>
    %88 = vector.shape_cast %87 : vector<1x128x128xbf16> to vector<128x128xbf16>
    %cst_28 = arith.constant dense<0.000000e+00> : vector<8x128xf32>
    %89 = tpu.matmul %86, %88, %cst_28 {dimension_numbers = #tpu.dot_dimension_numbers<[1], [0], [0], [1], [0, 0, 1, 1], [], []>} : vector<8x128xbf16>, vector<128x128xbf16>, vector<8x128xf32> -> vector<8x128xf32>
    %90 = vector.broadcast %6 : vector<1x128xf32> to vector<8x128xf32>
    %91 = arith.addf %89, %90 : vector<8x128xf32>
    %92 = arith.mulf %15, %91 : vector<8x128xf32>
    %cst_29 = arith.constant dense<0.000000e+00> : vector<128xf32>
    %93 = vector.multi_reduction <add>, %92, %cst_29 [0] : vector<8x128xf32> to vector<128xf32>
    %94 = vector.shape_cast %93 : vector<128xf32> to vector<1x128xf32>
    %95 = arith.mulf %92, %92 : vector<8x128xf32>
    %cst_30 = arith.constant dense<0.000000e+00> : vector<128xf32>
    %96 = vector.multi_reduction <add>, %95, %cst_30 [0] : vector<8x128xf32> to vector<128xf32>
    %97 = vector.shape_cast %96 : vector<128xf32> to vector<1x128xf32>
    %cst_31 = arith.constant 1.250000e-01 : f32
    %98 = vector.broadcast %cst_31 : f32 to vector<1x128xf32>
    %99 = arith.mulf %94, %98 : vector<1x128xf32>
    %cst_32 = arith.constant 1.250000e-01 : f32
    %100 = vector.broadcast %cst_32 : f32 to vector<1x128xf32>
    %101 = arith.mulf %97, %100 : vector<1x128xf32>
    %102 = arith.mulf %99, %99 : vector<1x128xf32>
    %103 = arith.subf %101, %102 : vector<1x128xf32>
    %cst_33 = arith.constant 0.000000e+00 : f32
    %104 = vector.broadcast %cst_33 : f32 to vector<1x128xf32>
    %105 = arith.maximumf %103, %104 : vector<1x128xf32>
    %106 = vector.broadcast %99 : vector<1x128xf32> to vector<8x128xf32>
    %107 = arith.subf %92, %106 : vector<8x128xf32>
    %cst_34 = arith.constant 9.99999974E-6 : f32
    %108 = vector.broadcast %cst_34 : f32 to vector<1x128xf32>
    %109 = arith.addf %105, %108 : vector<1x128xf32>
    %110 = math.rsqrt %109 : vector<1x128xf32>
    %111 = vector.broadcast %110 : vector<1x128xf32> to vector<8x128xf32>
    %112 = arith.mulf %107, %111 : vector<8x128xf32>
    %113 = vector.broadcast %7 : vector<1x128xf32> to vector<8x128xf32>
    %114 = arith.mulf %112, %113 : vector<8x128xf32>
    %115 = vector.broadcast %8 : vector<1x128xf32> to vector<8x128xf32>
    %116 = arith.addf %114, %115 : vector<8x128xf32>
    %cst_35 = arith.constant 2.000000e+01 : f32
    %117 = vector.broadcast %cst_35 : f32 to vector<8x128xf32>
    %118 = arith.minimumf %116, %117 : vector<8x128xf32>
    %119 = math.exp %118 : vector<8x128xf32>
    %cst_36 = arith.constant 9.99999974E-5 : f32
    %120 = vector.broadcast %cst_36 : f32 to vector<8x128xf32>
    %121 = arith.cmpf olt, %119, %120 : vector<8x128xf32>
    %cst_37 = arith.constant 1.000000e+00 : f32
    %122 = vector.broadcast %cst_37 : f32 to vector<8x128xf32>
    %123 = arith.addf %122, %119 : vector<8x128xf32>
    %124 = math.log %123 : vector<8x128xf32>
    %125 = arith.select %121, %119, %124 : vector<8x128xi1>, vector<8x128xf32>
    %cst_38 = arith.constant 2.000000e+01 : f32
    %126 = vector.broadcast %cst_38 : f32 to vector<8x128xf32>
    %127 = arith.cmpf ogt, %116, %126 : vector<8x128xf32>
    %128 = arith.select %127, %116, %125 : vector<8x128xi1>, vector<8x128xf32>
    %129 = arith.truncf %128 : vector<8x128xf32> to vector<8x128xbf16>
    %c2 = arith.constant 2 : index
    %c0_39 = arith.constant 0 : index
    %c0_40 = arith.constant 0 : index
    %130 = vector.load %arg3[%c2, %c0_39, %c0_40] : memref<4x128x128xbf16, #tpu.memory_space<vmem>>, vector<1x128x128xbf16>
    %131 = vector.shape_cast %130 : vector<1x128x128xbf16> to vector<128x128xbf16>
    %cst_41 = arith.constant dense<0.000000e+00> : vector<8x128xf32>
    %132 = tpu.matmul %129, %131, %cst_41 {dimension_numbers = #tpu.dot_dimension_numbers<[1], [0], [0], [1], [0, 0, 1, 1], [], []>} : vector<8x128xbf16>, vector<128x128xbf16>, vector<8x128xf32> -> vector<8x128xf32>
    %133 = vector.broadcast %9 : vector<1x128xf32> to vector<8x128xf32>
    %134 = arith.addf %132, %133 : vector<8x128xf32>
    %135 = arith.mulf %16, %134 : vector<8x128xf32>
    %cst_42 = arith.constant dense<0.000000e+00> : vector<128xf32>
    %136 = vector.multi_reduction <add>, %135, %cst_42 [0] : vector<8x128xf32> to vector<128xf32>
    %137 = vector.shape_cast %136 : vector<128xf32> to vector<1x128xf32>
    %138 = arith.mulf %135, %135 : vector<8x128xf32>
    %cst_43 = arith.constant dense<0.000000e+00> : vector<128xf32>
    %139 = vector.multi_reduction <add>, %138, %cst_43 [0] : vector<8x128xf32> to vector<128xf32>
    %140 = vector.shape_cast %139 : vector<128xf32> to vector<1x128xf32>
    %cst_44 = arith.constant 1.250000e-01 : f32
    %141 = vector.broadcast %cst_44 : f32 to vector<1x128xf32>
    %142 = arith.mulf %137, %141 : vector<1x128xf32>
    %cst_45 = arith.constant 1.250000e-01 : f32
    %143 = vector.broadcast %cst_45 : f32 to vector<1x128xf32>
    %144 = arith.mulf %140, %143 : vector<1x128xf32>
    %145 = arith.mulf %142, %142 : vector<1x128xf32>
    %146 = arith.subf %144, %145 : vector<1x128xf32>
    %cst_46 = arith.constant 0.000000e+00 : f32
    %147 = vector.broadcast %cst_46 : f32 to vector<1x128xf32>
    %148 = arith.maximumf %146, %147 : vector<1x128xf32>
    %149 = vector.broadcast %142 : vector<1x128xf32> to vector<8x128xf32>
    %150 = arith.subf %135, %149 : vector<8x128xf32>
    %cst_47 = arith.constant 9.99999974E-6 : f32
    %151 = vector.broadcast %cst_47 : f32 to vector<1x128xf32>
    %152 = arith.addf %148, %151 : vector<1x128xf32>
    %153 = math.rsqrt %152 : vector<1x128xf32>
    %154 = vector.broadcast %153 : vector<1x128xf32> to vector<8x128xf32>
    %155 = arith.mulf %150, %154 : vector<8x128xf32>
    %156 = vector.broadcast %10 : vector<1x128xf32> to vector<8x128xf32>
    %157 = arith.mulf %155, %156 : vector<8x128xf32>
    %158 = vector.broadcast %11 : vector<1x128xf32> to vector<8x128xf32>
    %159 = arith.addf %157, %158 : vector<8x128xf32>
    %cst_48 = arith.constant 2.000000e+01 : f32
    %160 = vector.broadcast %cst_48 : f32 to vector<8x128xf32>
    %161 = arith.minimumf %159, %160 : vector<8x128xf32>
    %162 = math.exp %161 : vector<8x128xf32>
    %cst_49 = arith.constant 9.99999974E-5 : f32
    %163 = vector.broadcast %cst_49 : f32 to vector<8x128xf32>
    %164 = arith.cmpf olt, %162, %163 : vector<8x128xf32>
    %cst_50 = arith.constant 1.000000e+00 : f32
    %165 = vector.broadcast %cst_50 : f32 to vector<8x128xf32>
    %166 = arith.addf %165, %162 : vector<8x128xf32>
    %167 = math.log %166 : vector<8x128xf32>
    %168 = arith.select %164, %162, %167 : vector<8x128xi1>, vector<8x128xf32>
    %cst_51 = arith.constant 2.000000e+01 : f32
    %169 = vector.broadcast %cst_51 : f32 to vector<8x128xf32>
    %170 = arith.cmpf ogt, %159, %169 : vector<8x128xf32>
    %171 = arith.select %170, %159, %168 : vector<8x128xi1>, vector<8x128xf32>
    %172 = arith.truncf %171 : vector<8x128xf32> to vector<8x128xbf16>
    %c3 = arith.constant 3 : index
    %c0_52 = arith.constant 0 : index
    %c0_53 = arith.constant 0 : index
    %173 = vector.load %arg3[%c3, %c0_52, %c0_53] : memref<4x128x128xbf16, #tpu.memory_space<vmem>>, vector<1x128x128xbf16>
    %174 = vector.shape_cast %173 : vector<1x128x128xbf16> to vector<128x128xbf16>
    %cst_54 = arith.constant dense<0.000000e+00> : vector<8x128xf32>
    %175 = tpu.matmul %172, %174, %cst_54 {dimension_numbers = #tpu.dot_dimension_numbers<[1], [0], [0], [1], [0, 0, 1, 1], [], []>} : vector<8x128xbf16>, vector<128x128xbf16>, vector<8x128xf32> -> vector<8x128xf32>
    %176 = vector.broadcast %12 : vector<1x128xf32> to vector<8x128xf32>
    %177 = arith.addf %175, %176 : vector<8x128xf32>
    %c0_55 = arith.constant 0 : index
    %c0_56 = arith.constant 0 : index
    %178 = vector.load %arg5[%c0_55, %c0_56] : memref<8x128xf32, #tpu.memory_space<vmem>>, vector<8x128xf32>
    tpu.vector_store %arg5[%c0_55, %c0_56], %177 {strides = array<i32>} : memref<8x128xf32, #tpu.memory_space<vmem>>, vector<8x128xf32>,
    return
  }
}

</mosaic_0001>

<llo_original>
// kernel: conditional_model_forward.1
$region0: #{conditional_model_forward.1}
  #allocation0 [shape = 'u32[]', space=smem, size = 0x4, offset = 0x4, fixed_abs, tag = 'smem constant byte address 0x4 - core index']
  #allocation1 [shape = 'u32[144,128]{1,0:T(1,128)}', space=vmem, size = 0x12000, scoped, tag = 'internal scratch']
  %s0 = inlined_call_operand.vmem [shape: bf16[8,128], index: 0, kind: input, shape index: {}]
  %s1 = inlined_call_operand.vmem [shape: f32[8,128], index: 1, kind: input, shape index: {}]
  %s2 = inlined_call_operand.vmem [shape: f32[8,384], index: 2, kind: input, shape index: {}]
  %s3 = inlined_call_operand.vmem [shape: bf16[4,128,128], index: 3, kind: input, shape index: {}]
  %s4 = inlined_call_operand.vmem [shape: f32[12,128], index: 4, kind: input, shape index: {}]
  %s5 = inlined_call_operand.hbm [shape: f32[8,128], index: 5, kind: output, shape index: {}]
  %s6 = sld [smem:[#allocation0]]
  $region30: #{conditional_model_forward.1} parent=0
    _
  %s8 = ssub.s32 1, %s6
  %s9 = scalar_select 0, %s8, %s6
  $region1: #{conditional_model_forward.1} parent=0
    #allocation2 [shape = 'u8[4096]{0}', space=vmem, size = 0x1000, scoped, tag = 'output window, operand 0, single buffered']
    #allocation3 [shape = 's32[1]{0}', space=sflag, size = 0x4, scoped, tag = 'scoped memory for conditional_model_forward.1']
    %10 = vsyncpa [#allocation3], 0
    // Predicated region
    $region2: #{conditional_model_forward.1} parent=1 // pred_check
      _
    $region3: #{conditional_model_forward.1} parent=1 // pred_check_branch
      %12 = sbr.rel (0) target = $region5
    $region4: #{conditional_model_forward.1} parent=1 // pred_region
      _
    $region5: #{conditional_model_forward.1} parent=1 // pred_fallthru
      _
    // Predicated region
    $region6: #{conditional_model_forward.1} parent=1 // pred_check
      _
    $region7: #{conditional_model_forward.1} parent=1 // pred_check_branch
      %14 = sbr.rel (0) target = $region9
    $region8: #{conditional_model_forward.1} parent=1 // pred_region
      _
    $region9: #{conditional_model_forward.1} parent=1 // pred_fallthru
      _
    // Predicated region
    $region10: #{conditional_model_forward.1} parent=1 // pred_check
      _
    $region11: #{conditional_model_forward.1} parent=1 // pred_check_branch
      %16 = sbr.rel (0) target = $region13
    $region12: #{conditional_model_forward.1} parent=1 // pred_region
      _
    $region13: #{conditional_model_forward.1} parent=1 // pred_fallthru
      _
    // Predicated region
    $region14: #{conditional_model_forward.1} parent=1 // pred_check
      _
    $region15: #{conditional_model_forward.1} parent=1 // pred_check_branch
      %18 = sbr.rel (0) target = $region17
    $region16: #{conditional_model_forward.1} parent=1 // pred_region
      _
    $region17: #{conditional_model_forward.1} parent=1 // pred_fallthru
      _
    // Predicated region
    $region18: #{conditional_model_forward.1} parent=1 // pred_check
      _
    $region19: #{conditional_model_forward.1} parent=1 // pred_check_branch
      %20 = sbr.rel (0) target = $region21
    $region20: #{conditional_model_forward.1} parent=1 // pred_region
      _
    $region21: #{conditional_model_forward.1} parent=1 // pred_fallthru
      _
    %v22 = vld [vmem:[%s4] sm:$0xff]
    %v23 = vld [vmem:[%s4 + $0x8] sm:$0xf]
    %v24 = vld [vmem:[%s2] sm:$0xff]
    %v25 = vld [vmem:[%s2 + $0x8] sm:$0xff]
    %v26 = vld [vmem:[%s2 + $0x10] sm:$0xff]
    %v27 = vld [vmem:[%s1] sm:$0xff]
    %v28 = vrot.slane %v27, 4
    %v29 = vadd.f32 %v27, %v28
    %v30 = vrot.slane %v29, 2
    %v31 = vadd.f32 %v29, %v30
    %v32 = vrot.slane %v31, 1
    %v33 = vadd.f32 %v31, %v32
    %v34 = vmul.f32 %v27, %v27
    %v35 = vrot.slane %v34, 4
    %v36 = vadd.f32 %v34, %v35
    %v37 = vrot.slane %v36, 2
    %v38 = vadd.f32 %v36, %v37
    %v39 = vrot.slane %v38, 1
    %v40 = vadd.f32 %v38, %v39
    %v41 = vmul.f32 %v33, 0.125
    %v42 = vmul.f32 %v40, 0.125
    %v43 = vmul.f32 %v41, %v41
    %v44 = vsub.f32 %v42, %v43
    %v45 = vmax.f32 %v44, 0.0
    %v46 = vsub.f32 %v27, %v41
    %v47 = vadd.f32 %v45, 1e-05
    %v48 = vrsqrt.pop %v47
    %v49 = vmul.f32 %v46, %v48
    %v50 = vlaneseq
    %v51 = vshrl.u32 %v50, 7
    %v52 = vsub.s32 0, %v51
    %v53 = vrot.slane %v22, %v52
    %v54 = vmul.f32 %v49, %v53
    %v55 = vlaneseq
    %v56 = vshrl.u32 %v55, 7
    %v57 = vsub.s32 1, %v56
    %v58 = vrot.slane %v22, %v57
    %v59 = vadd.f32 %v54, %v58
    %v60 = vld [vmem:[%s0] sm:$0xf]
    %v61 = vld [vmem:[%s3] sm:$0xf]
    %v62 = vld [vmem:[%s3 + $0x4] sm:$0xf]
    %v63 = vld [vmem:[%s3 + $0x8] sm:$0xf]
    %v64 = vld [vmem:[%s3 + $0xc] sm:$0xf]
    %v65 = vld [vmem:[%s3 + $0x10] sm:$0xf]
    %v66 = vld [vmem:[%s3 + $0x14] sm:$0xf]
    %v67 = vld [vmem:[%s3 + $0x18] sm:$0xf]
    %v68 = vld [vmem:[%s3 + $0x1c] sm:$0xf]
    %v69 = vld [vmem:[%s3 + $0x20] sm:$0xf]
    %v70 = vld [vmem:[%s3 + $0x24] sm:$0xf]
    %v71 = vld [vmem:[%s3 + $0x28] sm:$0xf]
    %v72 = vld [vmem:[%s3 + $0x2c] sm:$0xf]
    %v73 = vld [vmem:[%s3 + $0x30] sm:$0xf]
    %v74 = vld [vmem:[%s3 + $0x34] sm:$0xf]
    %v75 = vld [vmem:[%s3 + $0x38] sm:$0xf]
    %v76 = vld [vmem:[%s3 + $0x3c] sm:$0xf]
    %v77 = vlaneseq
    %v78 = vshrl.u32 %v77, 7
    %v79 = vsub.s32 2, %v78
    %v80 = vrot.slane %v22, %v79
    %v97 = vunpack.c.l.b16 %v61
    %v98 = vunpack.c.l.b16 %v62
    %v99 = vunpack.c.l.b16 %v63
    %v100 = vunpack.c.l.b16 %v64
    %v101 = vunpack.c.l.b16 %v65
    %v102 = vunpack.c.l.b16 %v66
    %v103 = vunpack.c.l.b16 %v67
    %v104 = vunpack.c.l.b16 %v68
    %v105 = vunpack.c.l.b16 %v69
    %v106 = vunpack.c.l.b16 %v70
    %v107 = vunpack.c.l.b16 %v71
    %v108 = vunpack.c.l.b16 %v72
    %v109 = vunpack.c.l.b16 %v73
    %v110 = vunpack.c.l.b16 %v74
    %v111 = vunpack.c.l.b16 %v75
    %v112 = vunpack.c.l.b16 %v76
    %v113 = vpack.c.b16 %v98, %v97
    %v114 = vpack.c.b16 %v100, %v99
    %v115 = vpack.c.b16 %v102, %v101
    %v116 = vpack.c.b16 %v104, %v103
    %v117 = vpack.c.b16 %v106, %v105
    %v118 = vpack.c.b16 %v108, %v107
    %v119 = vpack.c.b16 %v110, %v109
    %v120 = vpack.c.b16 %v112, %v111
    %129 = vmatprep.subr.bf16.mxu0 0
    %130 = vmatpush1.bf16.msra.mxu0 %v113
    %131 = vmatprep.subr.bf16.mxu0 0
    %132 = vmatpush1.bf16.msra.mxu0 %v114
    %133 = vmatprep.subr.bf16.mxu0 0
    %134 = vmatpush1.bf16.msra.mxu0 %v115
    %135 = vmatprep.subr.bf16.mxu0 0
    %136 = vmatpush1.bf16.msra.mxu0 %v116
    %137 = vmatprep.subr.bf16.mxu0 0
    %138 = vmatpush1.bf16.msra.mxu0 %v117
    %139 = vmatprep.subr.bf16.mxu0 0
    %140 = vmatpush1.bf16.msra.mxu0 %v118
    %141 = vmatprep.subr.bf16.mxu0 0
    %142 = vmatpush1.bf16.msra.mxu0 %v119
    %143 = vmatprep.subr.bf16.mxu0 0
    %144 = vmatpush1.bf16.msra.mxu0 %v120
    %145 = vmatprep.subr.bf16.mxu0 0
    %146 = vmatpush1.bf16.msra.mxu0 0
    %147 = vmatprep.subr.bf16.mxu0 0
    %148 = vmatpush1.bf16.msra.mxu0 0
    %149 = vmatprep.subr.bf16.mxu0 0
    %150 = vmatpush1.bf16.msra.mxu0 0
    %151 = vmatprep.subr.bf16.mxu0 0
    %152 = vmatpush1.bf16.msra.mxu0 0
    %153 = vmatprep.subr.bf16.mxu0 0
    %154 = vmatpush1.bf16.msra.mxu0 0
    %155 = vmatprep.subr.bf16.mxu0 0
    %156 = vmatpush1.bf16.msra.mxu0 0
    %157 = vmatprep.subr.bf16.mxu0 0
    %158 = vmatpush1.bf16.msra.mxu0 0
    %159 = vmatprep.subr.bf16.mxu0 0
    %160 = vmatpush1.bf16.msra.mxu0 0
    %161 = vmatprep.mubr.bf16.mxu0 0
    %162 = vmatmul.mubr.bf16.gmra.mrb[0].mxu0 %v60
    %v163 = vpop.f32.mrb[0].mxu0
    %v164 = vadd.f32 %v80, %v163
    %v165 = vpop.f32.mrb[0].mxu0
    %v166 = vpop.f32.mrb[0].mxu0
    %v167 = vpop.f32.mrb[0].mxu0
    %168 = vdwg.mxu0
    %v169 = vmul.f32 %v24, %v164
    %v170 = vrot.slane %v169, 4
    %v171 = vadd.f32 %v169, %v170
    %v172 = vrot.slane %v171, 2
    %v173 = vadd.f32 %v171, %v172
    %v174 = vrot.slane %v173, 1
    %v175 = vadd.f32 %v173, %v174
    %v176 = vmul.f32 %v169, %v169
    %v177 = vrot.slane %v176, 4
    %v178 = vadd.f32 %v176, %v177
    %v179 = vrot.slane %v178, 2
    %v180 = vadd.f32 %v178, %v179
    %v181 = vrot.slane %v180, 1
    %v182 = vadd.f32 %v180, %v181
    %v183 = vmul.f32 %v175, 0.125
    %v184 = vmul.f32 %v182, 0.125
    %v185 = vmul.f32 %v183, %v183
    %v186 = vsub.f32 %v184, %v185
    %v187 = vmax.f32 %v186, 0.0
    %v188 = vsub.f32 %v169, %v183
    %v189 = vadd.f32 %v187, 1e-05
    %v190 = vrsqrt.pop %v189
    %v191 = vmul.f32 %v188, %v190
    %v192 = vlaneseq
    %v193 = vshrl.u32 %v192, 7
    %v194 = vsub.s32 3, %v193
    %v195 = vrot.slane %v22, %v194
    %v196 = vmul.f32 %v191, %v195
    %v197 = vlaneseq
    %v198 = vshrl.u32 %v197, 7
    %v199 = vsub.s32 4, %v198
    %v200 = vrot.slane %v22, %v199
    %v201 = vadd.f32 %v196, %v200
    %v202 = vmin.f32 %v201, 20.0
    %v203 = vmul.f32 %v202, 1.442695
    %v204 = vpow.pop %v203
    %vm205 = vcmp.lt.f32.partialorder %v204, 0.0001
    %v206 = vadd.f32 %v204, 1.0
    %v207 = vlog2.pop %v206
    %v208 = vmul.f32 %v207, 0.6931472
    %v209 = vsel %vm205, %v204, %v208
    %vm210 = vcmp.gt.f32.partialorder %v201, 20.0
    %v211 = vsel %vm210, %v201, %v209
    %v212 = vmul.f32 %v211, %v59
    %v213 = vpack.c.bf16 %v212, %v212
    %s214 = scalar_lea.vmem %s3, 64
    %v215 = vld [vmem:[%s214] sm:$0xf]
    %v216 = vld [vmem:[%s214 + $0x4] sm:$0xf]
    %v217 = vld [vmem:[%s214 + $0x8] sm:$0xf]
    %v218 = vld [vmem:[%s214 + $0xc] sm:$0xf]
    %v219 = vld [vmem:[%s214 + $0x10] sm:$0xf]
    %v220 = vld [vmem:[%s214 + $0x14] sm:$0xf]
    %v221 = vld [vmem:[%s214 + $0x18] sm:$0xf]
    %v222 = vld [vmem:[%s214 + $0x1c] sm:$0xf]
    %v223 = vld [vmem:[%s214 + $0x20] sm:$0xf]
    %v224 = vld [vmem:[%s214 + $0x24] sm:$0xf]
    %v225 = vld [vmem:[%s214 + $0x28] sm:$0xf]
    %v226 = vld [vmem:[%s214 + $0x2c] sm:$0xf]
    %v227 = vld [vmem:[%s214 + $0x30] sm:$0xf]
    %v228 = vld [vmem:[%s214 + $0x34] sm:$0xf]
    %v229 = vld [vmem:[%s214 + $0x38] sm:$0xf]
    %v230 = vld [vmem:[%s214 + $0x3c] sm:$0xf]
    %v231 = vlaneseq
    %v232 = vshrl.u32 %v231, 7
    %v233 = vsub.s32 5, %v232
    %v234 = vrot.slane %v22, %v233
    %v251 = vunpack.c.l.b16 %v215
    %v252 = vunpack.c.l.b16 %v216
    %v253 = vunpack.c.l.b16 %v217
    %v254 = vunpack.c.l.b16 %v218
    %v255 = vunpack.c.l.b16 %v219
    %v256 = vunpack.c.l.b16 %v220
    %v257 = vunpack.c.l.b16 %v221
    %v258 = vunpack.c.l.b16 %v222
    %v259 = vunpack.c.l.b16 %v223
    %v260 = vunpack.c.l.b16 %v224
    %v261 = vunpack.c.l.b16 %v225
    %v262 = vunpack.c.l.b16 %v226
    %v263 = vunpack.c.l.b16 %v227
    %v264 = vunpack.c.l.b16 %v228
    %v265 = vunpack.c.l.b16 %v229
    %v266 = vunpack.c.l.b16 %v230
    %v267 = vpack.c.b16 %v252, %v251
    %v268 = vpack.c.b16 %v254, %v253
    %v269 = vpack.c.b16 %v256, %v255
    %v270 = vpack.c.b16 %v258, %v257
    %v271 = vpack.c.b16 %v260, %v259
    %v272 = vpack.c.b16 %v262, %v261
    %v273 = vpack.c.b16 %v264, %v263
    %v274 = vpack.c.b16 %v266, %v265
    %283 = vmatprep.subr.bf16.mxu0 0
    %284 = vmatpush1.bf16.msra.mxu0 %v267
    %285 = vmatprep.subr.bf16.mxu0 0
    %286 = vmatpush1.bf16.msra.mxu0 %v268
    %287 = vmatprep.subr.bf16.mxu0 0
    %288 = vmatpush1.bf16.msra.mxu0 %v269
    %289 = vmatprep.subr.bf16.mxu0 0
    %290 = vmatpush1.bf16.msra.mxu0 %v270
    %291 = vmatprep.subr.bf16.mxu0 0
    %292 = vmatpush1.bf16.msra.mxu0 %v271
    %293 = vmatprep.subr.bf16.mxu0 0
    %294 = vmatpush1.bf16.msra.mxu0 %v272
    %295 = vmatprep.subr.bf16.mxu0 0
    %296 = vmatpush1.bf16.msra.mxu0 %v273
    %297 = vmatprep.subr.bf16.mxu0 0
    %298 = vmatpush1.bf16.msra.mxu0 %v274
    %299 = vmatprep.subr.bf16.mxu0 0
    %300 = vmatpush1.bf16.msra.mxu0 0
    %301 = vmatprep.subr.bf16.mxu0 0
    %302 = vmatpush1.bf16.msra.mxu0 0
    %303 = vmatprep.subr.bf16.mxu0 0
    %304 = vmatpush1.bf16.msra.mxu0 0
    %305 = vmatprep.subr.bf16.mxu0 0
    %306 = vmatpush1.bf16.msra.mxu0 0
    %307 = vmatprep.subr.bf16.mxu0 0
    %308 = vmatpush1.bf16.msra.mxu0 0
    %309 = vmatprep.subr.bf16.mxu0 0
    %310 = vmatpush1.bf16.msra.mxu0 0
    %311 = vmatprep.subr.bf16.mxu0 0
    %312 = vmatpush1.bf16.msra.mxu0 0
    %313 = vmatprep.subr.bf16.mxu0 0
    %314 = vmatpush1.bf16.msra.mxu0 0
    %315 = vmatprep.mubr.bf16.mxu0 0
    %316 = vmatmul.mubr.bf16.gmra.mrb[0].mxu0 %v213
    %v317 = vpop.f32.mrb[0].mxu0
    %v318 = vadd.f32 %v234, %v317
    %v319 = vpop.f32.mrb[0].mxu0
    %v320 = vpop.f32.mrb[0].mxu0
    %v321 = vpop.f32.mrb[0].mxu0
    %322 = vdwg.mxu0
    %v323 = vmul.f32 %v25, %v318
    %v324 = vrot.slane %v323, 4
    %v325 = vadd.f32 %v323, %v324
    %v326 = vrot.slane %v325, 2
    %v327 = vadd.f32 %v325, %v326
    %v328 = vrot.slane %v327, 1
    %v329 = vadd.f32 %v327, %v328
    %v330 = vmul.f32 %v323, %v323
    %v331 = vrot.slane %v330, 4
    %v332 = vadd.f32 %v330, %v331
    %v333 = vrot.slane %v332, 2
    %v334 = vadd.f32 %v332, %v333
    %v335 = vrot.slane %v334, 1
    %v336 = vadd.f32 %v334, %v335
    %v337 = vmul.f32 %v329, 0.125
    %v338 = vmul.f32 %v336, 0.125
    %v339 = vmul.f32 %v337, %v337
    %v340 = vsub.f32 %v338, %v339
    %v341 = vmax.f32 %v340, 0.0
    %v342 = vsub.f32 %v323, %v337
    %v343 = vadd.f32 %v341, 1e-05
    %v344 = vrsqrt.pop %v343
    %v345 = vmul.f32 %v342, %v344
    %v346 = vlaneseq
    %v347 = vshrl.u32 %v346, 7
    %v348 = vsub.s32 6, %v347
    %v349 = vrot.slane %v22, %v348
    %v350 = vmul.f32 %v345, %v349
    %v351 = vlaneseq
    %v352 = vshrl.u32 %v351, 7
    %v353 = vsub.s32 7, %v352
    %v354 = vrot.slane %v22, %v353
    %v355 = vadd.f32 %v350, %v354
    %v356 = vmin.f32 %v355, 20.0
    %v357 = vmul.f32 %v356, 1.442695
    %v358 = vpow.pop %v357
    %vm359 = vcmp.lt.f32.partialorder %v358, 0.0001
    %v360 = vadd.f32 %v358, 1.0
    %v361 = vlog2.pop %v360
    %v362 = vmul.f32 %v361, 0.6931472
    %v363 = vsel %vm359, %v358, %v362
    %vm364 = vcmp.gt.f32.partialorder %v355, 20.0
    %v365 = vsel %vm364, %v355, %v363
    %v366 = vpack.c.bf16 %v365, %v365
    %s367 = scalar_lea.vmem %s3, 128
    %v368 = vld [vmem:[%s367] sm:$0xf]
    %v369 = vld [vmem:[%s367 + $0x4] sm:$0xf]
    %v370 = vld [vmem:[%s367 + $0x8] sm:$0xf]
    %v371 = vld [vmem:[%s367 + $0xc] sm:$0xf]
    %v372 = vld [vmem:[%s367 + $0x10] sm:$0xf]
    %v373 = vld [vmem:[%s367 + $0x14] sm:$0xf]
    %v374 = vld [vmem:[%s367 + $0x18] sm:$0xf]
    %v375 = vld [vmem:[%s367 + $0x1c] sm:$0xf]
    %v376 = vld [vmem:[%s367 + $0x20] sm:$0xf]
    %v377 = vld [vmem:[%s367 + $0x24] sm:$0xf]
    %v378 = vld [vmem:[%s367 + $0x28] sm:$0xf]
    %v379 = vld [vmem:[%s367 + $0x2c] sm:$0xf]
    %v380 = vld [vmem:[%s367 + $0x30] sm:$0xf]
    %v381 = vld [vmem:[%s367 + $0x34] sm:$0xf]
    %v382 = vld [vmem:[%s367 + $0x38] sm:$0xf]
    %v383 = vld [vmem:[%s367 + $0x3c] sm:$0xf]
    %v384 = vlaneseq
    %v385 = vshrl.u32 %v384, 7
    %v386 = vsub.s32 0, %v385
    %v387 = vrot.slane %v23, %v386
    %v404 = vunpack.c.l.b16 %v368
    %v405 = vunpack.c.l.b16 %v369
    %v406 = vunpack.c.l.b16 %v370
    %v407 = vunpack.c.l.b16 %v371
    %v408 = vunpack.c.l.b16 %v372
    %v409 = vunpack.c.l.b16 %v373
    %v410 = vunpack.c.l.b16 %v374
    %v411 = vunpack.c.l.b16 %v375
    %v412 = vunpack.c.l.b16 %v376
    %v413 = vunpack.c.l.b16 %v377
    %v414 = vunpack.c.l.b16 %v378
    %v415 = vunpack.c.l.b16 %v379
    %v416 = vunpack.c.l.b16 %v380
    %v417 = vunpack.c.l.b16 %v381
    %v418 = vunpack.c.l.b16 %v382
    %v419 = vunpack.c.l.b16 %v383
    %v420 = vpack.c.b16 %v405, %v404
    %v421 = vpack.c.b16 %v407, %v406
    %v422 = vpack.c.b16 %v409, %v408
    %v423 = vpack.c.b16 %v411, %v410
    %v424 = vpack.c.b16 %v413, %v412
    %v425 = vpack.c.b16 %v415, %v414
    %v426 = vpack.c.b16 %v417, %v416
    %v427 = vpack.c.b16 %v419, %v418
    %436 = vmatprep.subr.bf16.mxu0 0
    %437 = vmatpush1.bf16.msra.mxu0 %v420
    %438 = vmatprep.subr.bf16.mxu0 0
    %439 = vmatpush1.bf16.msra.mxu0 %v421
    %440 = vmatprep.subr.bf16.mxu0 0
    %441 = vmatpush1.bf16.msra.mxu0 %v422
    %442 = vmatprep.subr.bf16.mxu0 0
    %443 = vmatpush1.bf16.msra.mxu0 %v423
    %444 = vmatprep.subr.bf16.mxu0 0
    %445 = vmatpush1.bf16.msra.mxu0 %v424
    %446 = vmatprep.subr.bf16.mxu0 0
    %447 = vmatpush1.bf16.msra.mxu0 %v425
    %448 = vmatprep.subr.bf16.mxu0 0
    %449 = vmatpush1.bf16.msra.mxu0 %v426
    %450 = vmatprep.subr.bf16.mxu0 0
    %451 = vmatpush1.bf16.msra.mxu0 %v427
    %452 = vmatprep.subr.bf16.mxu0 0
    %453 = vmatpush1.bf16.msra.mxu0 0
    %454 = vmatprep.subr.bf16.mxu0 0
    %455 = vmatpush1.bf16.msra.mxu0 0
    %456 = vmatprep.subr.bf16.mxu0 0
    %457 = vmatpush1.bf16.msra.mxu0 0
    %458 = vmatprep.subr.bf16.mxu0 0
    %459 = vmatpush1.bf16.msra.mxu0 0
    %460 = vmatprep.subr.bf16.mxu0 0
    %461 = vmatpush1.bf16.msra.mxu0 0
    %462 = vmatprep.subr.bf16.mxu0 0
    %463 = vmatpush1.bf16.msra.mxu0 0
    %464 = vmatprep.subr.bf16.mxu0 0
    %465 = vmatpush1.bf16.msra.mxu0 0
    %466 = vmatprep.subr.bf16.mxu0 0
    %467 = vmatpush1.bf16.msra.mxu0 0
    %468 = vmatprep.mubr.bf16.mxu0 0
    %469 = vmatmul.mubr.bf16.gmra.mrb[0].mxu0 %v366
    %v470 = vpop.f32.mrb[0].mxu0
    %v471 = vadd.f32 %v387, %v470
    %v472 = vpop.f32.mrb[0].mxu0
    %v473 = vpop.f32.mrb[0].mxu0
    %v474 = vpop.f32.mrb[0].mxu0
    %475 = vdwg.mxu0
    %v476 = vmul.f32 %v26, %v471
    %v477 = vrot.slane %v476, 4
    %v478 = vadd.f32 %v476, %v477
    %v479 = vrot.slane %v478, 2
    %v480 = vadd.f32 %v478, %v479
    %v481 = vrot.slane %v480, 1
    %v482 = vadd.f32 %v480, %v481
    %v483 = vmul.f32 %v476, %v476
    %v484 = vrot.slane %v483, 4
    %v485 = vadd.f32 %v483, %v484
    %v486 = vrot.slane %v485, 2
    %v487 = vadd.f32 %v485, %v486
    %v488 = vrot.slane %v487, 1
    %v489 = vadd.f32 %v487, %v488
    %v490 = vmul.f32 %v482, 0.125
    %v491 = vmul.f32 %v489, 0.125
    %v492 = vmul.f32 %v490, %v490
    %v493 = vsub.f32 %v491, %v492
    %v494 = vmax.f32 %v493, 0.0
    %v495 = vsub.f32 %v476, %v490
    %v496 = vadd.f32 %v494, 1e-05
    %v497 = vrsqrt.pop %v496
    %v498 = vmul.f32 %v495, %v497
    %v499 = vlaneseq
    %v500 = vshrl.u32 %v499, 7
    %v501 = vsub.s32 1, %v500
    %v502 = vrot.slane %v23, %v501
    %v503 = vmul.f32 %v498, %v502
    %v504 = vlaneseq
    %v505 = vshrl.u32 %v504, 7
    %v506 = vsub.s32 2, %v505
    %v507 = vrot.slane %v23, %v506
    %v508 = vadd.f32 %v503, %v507
    %v509 = vmin.f32 %v508, 20.0
    %v510 = vmul.f32 %v509, 1.442695
    %v511 = vpow.pop %v510
    %vm512 = vcmp.lt.f32.partialorder %v511, 0.0001
    %v513 = vadd.f32 %v511, 1.0
    %v514 = vlog2.pop %v513
    %v515 = vmul.f32 %v514, 0.6931472
    %v516 = vsel %vm512, %v511, %v515
    %vm517 = vcmp.gt.f32.partialorder %v508, 20.0
    %v518 = vsel %vm517, %v508, %v516
    %v519 = vpack.c.bf16 %v518, %v518
    %s520 = scalar_lea.vmem %s3, 192
    %v521 = vld [vmem:[%s520] sm:$0xf]
    %v522 = vld [vmem:[%s520 + $0x4] sm:$0xf]
    %v523 = vld [vmem:[%s520 + $0x8] sm:$0xf]
    %v524 = vld [vmem:[%s520 + $0xc] sm:$0xf]
    %v525 = vld [vmem:[%s520 + $0x10] sm:$0xf]
    %v526 = vld [vmem:[%s520 + $0x14] sm:$0xf]
    %v527 = vld [vmem:[%s520 + $0x18] sm:$0xf]
    %v528 = vld [vmem:[%s520 + $0x1c] sm:$0xf]
    %v529 = vld [vmem:[%s520 + $0x20] sm:$0xf]
    %v530 = vld [vmem:[%s520 + $0x24] sm:$0xf]
    %v531 = vld [vmem:[%s520 + $0x28] sm:$0xf]
    %v532 = vld [vmem:[%s520 + $0x2c] sm:$0xf]
    %v533 = vld [vmem:[%s520 + $0x30] sm:$0xf]
    %v534 = vld [vmem:[%s520 + $0x34] sm:$0xf]
    %v535 = vld [vmem:[%s520 + $0x38] sm:$0xf]
    %v536 = vld [vmem:[%s520 + $0x3c] sm:$0xf]
    %v537 = vlaneseq
    %v538 = vshrl.u32 %v537, 7
    %v539 = vsub.s32 3, %v538
    %v540 = vrot.slane %v23, %v539
    %v557 = vunpack.c.l.b16 %v521
    %v558 = vunpack.c.l.b16 %v522
    %v559 = vunpack.c.l.b16 %v523
    %v560 = vunpack.c.l.b16 %v524
    %v561 = vunpack.c.l.b16 %v525
    %v562 = vunpack.c.l.b16 %v526
    %v563 = vunpack.c.l.b16 %v527
    %v564 = vunpack.c.l.b16 %v528
    %v565 = vunpack.c.l.b16 %v529
    %v566 = vunpack.c.l.b16 %v530
    %v567 = vunpack.c.l.b16 %v531
    %v568 = vunpack.c.l.b16 %v532
    %v569 = vunpack.c.l.b16 %v533
    %v570 = vunpack.c.l.b16 %v534
    %v571 = vunpack.c.l.b16 %v535
    %v572 = vunpack.c.l.b16 %v536
    %v573 = vpack.c.b16 %v558, %v557
    %v574 = vpack.c.b16 %v560, %v559
    %v575 = vpack.c.b16 %v562, %v561
    %v576 = vpack.c.b16 %v564, %v563
    %v577 = vpack.c.b16 %v566, %v565
    %v578 = vpack.c.b16 %v568, %v567
    %v579 = vpack.c.b16 %v570, %v569
    %v580 = vpack.c.b16 %v572, %v571
    %589 = vmatprep.subr.bf16.mxu0 0
    %590 = vmatpush1.bf16.msra.mxu0 %v573
    %591 = vmatprep.subr.bf16.mxu0 0
    %592 = vmatpush1.bf16.msra.mxu0 %v574
    %593 = vmatprep.subr.bf16.mxu0 0
    %594 = vmatpush1.bf16.msra.mxu0 %v575
    %595 = vmatprep.subr.bf16.mxu0 0
    %596 = vmatpush1.bf16.msra.mxu0 %v576
    %597 = vmatprep.subr.bf16.mxu0 0
    %598 = vmatpush1.bf16.msra.mxu0 %v577
    %599 = vmatprep.subr.bf16.mxu0 0
    %600 = vmatpush1.bf16.msra.mxu0 %v578
    %601 = vmatprep.subr.bf16.mxu0 0
    %602 = vmatpush1.bf16.msra.mxu0 %v579
    %603 = vmatprep.subr.bf16.mxu0 0
    %604 = vmatpush1.bf16.msra.mxu0 %v580
    %605 = vmatprep.subr.bf16.mxu0 0
    %606 = vmatpush1.bf16.msra.mxu0 0
    %607 = vmatprep.subr.bf16.mxu0 0
    %608 = vmatpush1.bf16.msra.mxu0 0
    %609 = vmatprep.subr.bf16.mxu0 0
    %610 = vmatpush1.bf16.msra.mxu0 0
    %611 = vmatprep.subr.bf16.mxu0 0
    %612 = vmatpush1.bf16.msra.mxu0 0
    %613 = vmatprep.subr.bf16.mxu0 0
    %614 = vmatpush1.bf16.msra.mxu0 0
    %615 = vmatprep.subr.bf16.mxu0 0
    %616 = vmatpush1.bf16.msra.mxu0 0
    %617 = vmatprep.subr.bf16.mxu0 0
    %618 = vmatpush1.bf16.msra.mxu0 0
    %619 = vmatprep.subr.bf16.mxu0 0
    %620 = vmatpush1.bf16.msra.mxu0 0
    %621 = vmatprep.mubr.bf16.mxu0 0
    %622 = vmatmul.mubr.bf16.gmra.mrb[0].mxu0 %v519
    %v623 = vpop.f32.mrb[0].mxu0
    %v624 = vadd.f32 %v540, %v623
    %v625 = vpop.f32.mrb[0].mxu0
    %v626 = vpop.f32.mrb[0].mxu0
    %v627 = vpop.f32.mrb[0].mxu0
    %628 = vdwg.mxu0
    %629 = vst [vmem:[#allocation2] sm:$0xff] %v624
    // Predicated region
    $region22: #{conditional_model_forward.1} parent=1 // pred_check
      _
    $region23: #{conditional_model_forward.1} parent=1 // pred_check_branch
      %631 = sbr.rel (0) target = $region25
    $region24: #{conditional_model_forward.1} parent=1 // pred_region
      %s633 = ssub.s32 128, 128
      %634 = vsyncadd [#allocation3], %s633
      %s636 = sshll.u32 [#allocation2], 4
      %s637 = int_to_ptr.vmem [resolvable:$true] %s636
      %639 = dma.vmem_to_hbm [thread:$0]  %s637, 128, %s5, [#allocation3]
    $region25: #{conditional_model_forward.1} parent=1 // pred_fallthru
      _
    // Predicated region
    $region26: #{conditional_model_forward.1} parent=1 // pred_check
      _
    $region27: #{conditional_model_forward.1} parent=1 // pred_check_branch
      %641 = sbr.rel (0) target = $region29
    $region28: #{conditional_model_forward.1} parent=1 // pred_region
      %642 = dma.done [#allocation3], 128
    $region29: #{conditional_model_forward.1} parent=1 // pred_fallthru
      _
    %643 = vsyncpa [#allocation3], 1

</llo_original>
